<compile_context>
chip_gen: v5e
topology: v5e:2x2
jax: 0.10.0
libtpu: 0.0.40
codegen_flags: <defaults>
</compile_context>

<pallas_src>
import jax
import jax.numpy as jnp
from jax.experimental import pallas as pl
from jax.experimental.pallas import tpu as pltpu


_NEG_BIG = -1e30  # bias fill for padded class lanes; exp() underflows to 0.


def _round_up(x, m):
    return ((x + m - 1) // m) * m


def _mlp_logsoftmax_kernel(x_ref, w1_ref, b1_ref, w2_ref, b2_ref, o_ref):
    # First Linear: bf16 x bf16 on the MXU with f32 accumulation.
    h = jnp.dot(x_ref[...], w1_ref[...], preferred_element_type=jnp.float32)
    # f32 epilogue (bias + ReLU).
    h = jnp.maximum(h + b1_ref[...], 0.0)

    # Second Linear (f32 in / f32 acc) + bias. Padded class lanes get ~-1e30.
    logits = jnp.dot(h, w2_ref[...], preferred_element_type=jnp.float32)
    logits = logits + b2_ref[...]

    # Numerically stable log-softmax over the class (lane) dimension.
    m = jnp.max(logits, axis=-1, keepdims=True)
    shifted = logits - m
    lse = jnp.log(jnp.sum(jnp.exp(shifted), axis=-1, keepdims=True))
    o_ref[...] = (shifted - lse).astype(o_ref.dtype)


def transfer_classifier_forward(x, w1, b1, w2, b2, *, tile_b=256,
                                matmul_dtype=jnp.bfloat16):
    """Forward pass of TransferClassifier.

    x: (B, 1000); w1: (1000, H); b1: (H,); w2: (H, O); b2: (O,)
    (weights given as (in, out), i.e. already transposed from PyTorch layout).
    Returns log-probabilities of shape (B, O) in float32.
    """
    B, K = x.shape
    H = w1.shape[1]
    O = w2.shape[1]

    K_pad = _round_up(K, 128)          # 1000 -> 1024: dense lane loads, clean MXU K
    H_pad = _round_up(H, 128)          # lane-dense intermediate
    O_pad = _round_up(O, 128)          # lane-dense (unmasked) output stores

    # Batch tile: >=128/256 at production batch, shrink for tiny batches so we
    # don't pad 16x for the toy test. Must stay a multiple of 8 (sublanes).
    tb = min(tile_b, _round_up(B, 8))
    B_pad = _round_up(B, tb)
    grid = (B_pad // tb,)

    # Pad + cast. x/w1 -> bf16 (half the HBM bytes); everything else f32.
    x_p = jnp.zeros((B_pad, K_pad), matmul_dtype).at[:B, :K].set(
        x.astype(matmul_dtype))
    w1_p = jnp.zeros((K_pad, H_pad), matmul_dtype).at[:K, :H].set(
        w1.astype(matmul_dtype))
    b1_p = jnp.zeros((1, H_pad), jnp.float32).at[0, :H].set(
        b1.astype(jnp.float32))
    w2_p = jnp.zeros((H_pad, O_pad), jnp.float32).at[:H, :O].set(
        w2.astype(jnp.float32))
    b2_p = jnp.full((1, O_pad), _NEG_BIG, jnp.float32).at[0, :O].set(
        b2.astype(jnp.float32))

    itemsize = jnp.dtype(matmul_dtype).itemsize
    bytes_accessed = (
        x_p.size * itemsize + w1_p.size * itemsize
        + (b1_p.size + w2_p.size + b2_p.size) * 4
        + B_pad * O_pad * 4)

    out = pl.pallas_call(
        _mlp_logsoftmax_kernel,
        out_shape=jax.ShapeDtypeStruct((B_pad, O_pad), jnp.float32),
        grid=grid,
        in_specs=[
            pl.BlockSpec((tb, K_pad), lambda i: (i, 0)),      # x: streamed per tile
            pl.BlockSpec((K_pad, H_pad), lambda i: (0, 0)),   # w1: resident in VMEM
            pl.BlockSpec((1, H_pad), lambda i: (0, 0)),       # b1: resident
            pl.BlockSpec((H_pad, O_pad), lambda i: (0, 0)),   # w2: resident
            pl.BlockSpec((1, O_pad), lambda i: (0, 0)),       # b2: resident
        ],
        out_specs=pl.BlockSpec((tb, O_pad), lambda i: (i, 0)),
        compiler_params=pltpu.CompilerParams(
            dimension_semantics=("parallel",)),
        cost_estimate=pl.CostEstimate(
            flops=2 * B_pad * (K_pad * H_pad + H_pad * O_pad),
            transcendentals=B_pad * O_pad,
            bytes_accessed=bytes_accessed),
    )(x_p, w1_p, b1_p, w2_p, b2_p)

    return out[:B, :O]


def _reference_forward(x, w1, b1, w2, b2, matmul_dtype=jnp.bfloat16):
    # Mirror the kernel's numerics: x/w1 rounded to bf16, f32 accumulation,
    # f32 epilogue and log-softmax.
    xq = x.astype(matmul_dtype).astype(jnp.float32)
    w1q = w1.astype(matmul_dtype).astype(jnp.float32)
    h = jnp.maximum(
        jnp.dot(xq, w1q, precision=jax.lax.Precision.HIGHEST) + b1, 0.0)
    logits = jnp.dot(h, w2, precision=jax.lax.Precision.HIGHEST) + b2
    return jax.nn.log_softmax(logits, axis=-1)


if __name__ == "__main__":
    # Small shapes consistent with the module:
    #   input features fixed at 1000, proj_hidden_features=32, proj_output_features=16
    B, IN_F, HID, OUT = 8, 1000, 32, 16

    key = jax.random.PRNGKey(0)
    kx, kw1, kb1, kw2, kb2 = jax.random.split(key, 5)

    x = jax.random.normal(kx, (B, IN_F), dtype=jnp.float32)

    # Deterministic PyTorch-like uniform fan-in init, stored as (in, out).
    lim1 = 1.0 / jnp.sqrt(IN_F)
    w1 = jax.random.uniform(kw1, (IN_F, HID), minval=-lim1, maxval=lim1,
                            dtype=jnp.float32)
    b1 = jax.random.uniform(kb1, (HID,), minval=-lim1, maxval=lim1,
                            dtype=jnp.float32)
    lim2 = 1.0 / jnp.sqrt(HID)
    w2 = jax.random.uniform(kw2, (HID, OUT), minval=-lim2, maxval=lim2,
                            dtype=jnp.float32)
    b2 = jax.random.uniform(kb2, (OUT,), minval=-lim2, maxval=lim2,
                            dtype=jnp.float32)

    out = transfer_classifier_forward(x, w1, b1, w2, b2)
    out = jax.block_until_ready(out)

    ref = _reference_forward(x, w1, b1, w2, b2)
    assert out.shape == (B, OUT)
    assert jnp.allclose(out, ref, atol=1e-4, rtol=1e-4), "mismatch vs reference"
    # Log-probabilities must normalize (padded class lanes excluded correctly).
    assert jnp.allclose(jnp.sum(jnp.exp(out), axis=-1), 1.0, atol=1e-4)

    print("KERNEL_OK")
</pallas_src>

<mosaic_0001>
module attributes {stable_mosaic.version = 11 : i64} {
  func.func @_mlp_logsoftmax_kernel(%arg0: i32, %arg1: memref<8x1024xbf16, #tpu.memory_space<vmem>>, %arg2: memref<1024x128xbf16, #tpu.memory_space<vmem>>, %arg3: memref<1x128xf32, #tpu.memory_space<vmem>>, %arg4: memref<128x128xf32, #tpu.memory_space<vmem>>, %arg5: memref<1x128xf32, #tpu.memory_space<vmem>>, %arg6: memref<8x128xf32, #tpu.memory_space<vmem>>) attributes {dimension_semantics = [#tpu.dimension_semantics<parallel>], iteration_bounds = array<i64: 1>, scalar_prefetch = 0 : i64, scratch_operands = 0 : i64, tpu.core_type = #tpu.core_type<tc>, window_params = [{transform_indices = @transform_0, window_bounds = array<i64: 8, 1024>}, {pipeline_mode = #tpu.pipeline_mode<synchronous>, transform_indices = @transform_1, window_bounds = array<i64: 1024, 128>}, {pipeline_mode = #tpu.pipeline_mode<synchronous>, transform_indices = @transform_2, window_bounds = array<i64: 1, 128>}, {pipeline_mode = #tpu.pipeline_mode<synchronous>, transform_indices = @transform_3, window_bounds = array<i64: 128, 128>}, {pipeline_mode = #tpu.pipeline_mode<synchronous>, transform_indices = @transform_4, window_bounds = array<i64: 1, 128>}, {transform_indices = @transform_5, window_bounds = array<i64: 8, 128>}]} {
    %c0 = arith.constant 0 : index
    %c0_0 = arith.constant 0 : index
    %0 = vector.load %arg1[%c0, %c0_0] : memref<8x1024xbf16, #tpu.memory_space<vmem>>, vector<8x1024xbf16>
    %c0_1 = arith.constant 0 : index
    %c0_2 = arith.constant 0 : index
    %1 = vector.load %arg2[%c0_1, %c0_2] : memref<1024x128xbf16, #tpu.memory_space<vmem>>, vector<1024x128xbf16>
    %cst = arith.constant dense<0.000000e+00> : vector<8x128xf32>
    %2 = tpu.matmul %0, %1, %cst {dimension_numbers = #tpu.dot_dimension_numbers<[1], [0], [0], [1], [0, 0, 1, 1], [], []>} : vector<8x1024xbf16>, vector<1024x128xbf16>, vector<8x128xf32> -> vector<8x128xf32>
    %c0_3 = arith.constant 0 : index
    %c0_4 = arith.constant 0 : index
    %3 = vector.load %arg3[%c0_3, %c0_4] : memref<1x128xf32, #tpu.memory_space<vmem>>, vector<1x128xf32>
    %4 = vector.broadcast %3 : vector<1x128xf32> to vector<8x128xf32>
    %5 = arith.addf %2, %4 : vector<8x128xf32>
    %cst_5 = arith.constant 0.000000e+00 : f32
    %6 = vector.broadcast %cst_5 : f32 to vector<8x128xf32>
    %7 = arith.maximumf %5, %6 : vector<8x128xf32>
    %c0_6 = arith.constant 0 : index
    %c0_7 = arith.constant 0 : index
    %8 = vector.load %arg4[%c0_6, %c0_7] : memref<128x128xf32, #tpu.memory_space<vmem>>, vector<128x128xf32>
    %cst_8 = arith.constant dense<0.000000e+00> : vector<8x128xf32>
    %9 = tpu.matmul %7, %8, %cst_8 {dimension_numbers = #tpu.dot_dimension_numbers<[1], [0], [0], [1], [0, 0, 1, 1], [], []>} : vector<8x128xf32>, vector<128x128xf32>, vector<8x128xf32> -> vector<8x128xf32>
    %c0_9 = arith.constant 0 : index
    %c0_10 = arith.constant 0 : index
    %10 = vector.load %arg5[%c0_9, %c0_10] : memref<1x128xf32, #tpu.memory_space<vmem>>, vector<1x128xf32>
    %11 = vector.broadcast %10 : vector<1x128xf32> to vector<8x128xf32>
    %12 = arith.addf %9, %11 : vector<8x128xf32>
    %cst_11 = arith.constant dense<0xFF800000> : vector<8xf32>
    %13 = vector.multi_reduction <maximumf>, %12, %cst_11 [1] : vector<8x128xf32> to vector<8xf32>
    %14 = vector.shape_cast %13 : vector<8xf32> to vector<8x1xf32>
    %15 = vector.broadcast %14 : vector<8x1xf32> to vector<8x128xf32>
    %16 = arith.subf %12, %15 : vector<8x128xf32>
    %17 = math.exp %16 : vector<8x128xf32>
    %cst_12 = arith.constant dense<0.000000e+00> : vector<8xf32>
    %18 = vector.multi_reduction <add>, %17, %cst_12 [1] : vector<8x128xf32> to vector<8xf32>
    %19 = vector.shape_cast %18 : vector<8xf32> to vector<8x1xf32>
    %20 = math.log %19 : vector<8x1xf32>
    %21 = vector.broadcast %20 : vector<8x1xf32> to vector<8x128xf32>
    %22 = arith.subf %16, %21 : vector<8x128xf32>
    %c0_13 = arith.constant 0 : index
    %c0_14 = arith.constant 0 : index
    %23 = vector.load %arg6[%c0_13, %c0_14] : memref<8x128xf32, #tpu.memory_space<vmem>>, vector<8x128xf32>
    tpu.vector_store %arg6[%c0_13, %c0_14], %22 {strides = array<i32>} : memref<8x128xf32, #tpu.memory_space<vmem>>, vector<8x128xf32>,
    return
  }
  func.func @transform_0(%arg0: i32) -> (i32, i32) {
    %c0_i32 = arith.constant 0 : i32
    %c0_i32_0 = arith.constant 0 : i32
    return %arg0, %c0_i32 : i32, i32
  }
  func.func @transform_1(%arg0: i32) -> (i32, i32) {
    %c0_i32 = arith.constant 0 : i32
    %c0_i32_0 = arith.constant 0 : i32
    %c0_i32_1 = arith.constant 0 : i32
    return %c0_i32, %c0_i32_0 : i32, i32
  }
  func.func @transform_2(%arg0: i32) -> (i32, i32) {
    %c0_i32 = arith.constant 0 : i32
    %c0_i32_0 = arith.constant 0 : i32
    %c0_i32_1 = arith.constant 0 : i32
    return %c0_i32, %c0_i32_0 : i32, i32
  }
  func.func @transform_3(%arg0: i32) -> (i32, i32) {
    %c0_i32 = arith.constant 0 : i32
    %c0_i32_0 = arith.constant 0 : i32
    %c0_i32_1 = arith.constant 0 : i32
    return %c0_i32, %c0_i32_0 : i32, i32
  }
  func.func @transform_4(%arg0: i32) -> (i32, i32) {
    %c0_i32 = arith.constant 0 : i32
    %c0_i32_0 = arith.constant 0 : i32
    %c0_i32_1 = arith.constant 0 : i32
    return %c0_i32, %c0_i32_0 : i32, i32
  }
  func.func @transform_5(%arg0: i32) -> (i32, i32) {
    %c0_i32 = arith.constant 0 : i32
    %c0_i32_0 = arith.constant 0 : i32
    return %arg0, %c0_i32 : i32, i32
  }
}

</mosaic_0001>

<llo_original>
// kernel: tpu_custom_call.1
$region0: #{tpu_custom_call.1}
  #allocation0 [shape = 'u32[]', space=smem, size = 0x4, offset = 0x4, fixed_abs, tag = 'smem constant byte address 0x4 - core index']
  #allocation1 [shape = 'u32[72,128]{1,0:T(1,128)}', space=vmem, size = 0x9000, scoped, tag = 'internal scratch']
  %s0 = inlined_call_operand.hbm [shape: bf16[8,1024], index: 0, kind: input, shape index: {}]
  %s1 = inlined_call_operand.hbm [shape: bf16[1024,128], index: 1, kind: input, shape index: {}]
  %s2 = inlined_call_operand.vmem [shape: f32[1,128], index: 2, kind: input, shape index: {}]
  %s3 = inlined_call_operand.hbm [shape: f32[128,128], index: 3, kind: input, shape index: {}]
  %s4 = inlined_call_operand.vmem [shape: f32[1,128], index: 4, kind: input, shape index: {}]
  %s5 = inlined_call_operand.hbm [shape: f32[8,128], index: 5, kind: output, shape index: {}]
  %s6 = sld [smem:[#allocation0]]
  $region42: #{tpu_custom_call.1} parent=0
    _
  %s8 = ssub.s32 1, %s6
  %s9 = scalar_select 0, %s8, %s6
  $region1: #{tpu_custom_call.1} parent=0
    #allocation2 [shape = 'u8[16384]{0}', space=vmem, size = 0x4000, scoped, tag = 'input window, operand 0, single buffered']
    #allocation3 [shape = 's32[1]{0}', space=sflag, size = 0x4, scoped, tag = 'scoped memory for tpu_custom_call.1']
    #allocation4 [shape = 's32[1]{0}', space=sflag, size = 0x4, scoped, tag = 'scoped memory for tpu_custom_call.1']
    #allocation5 [shape = 'u8[262144]{0}', space=vmem, size = 0x40000, scoped, tag = 'input window, operand 1, single buffered']
    #allocation6 [shape = 's32[1]{0}', space=sflag, size = 0x4, scoped, tag = 'scoped memory for tpu_custom_call.1']
    #allocation7 [shape = 'u8[65536]{0}', space=vmem, size = 0x10000, scoped, tag = 'input window, operand 3, single buffered']
    #allocation8 [shape = 'u8[4096]{0}', space=vmem, size = 0x1000, scoped, tag = 'output window, operand 0, single buffered']
    %10 = vsyncpa [#allocation3], 0
    %11 = vsyncpa [#allocation6], 0
    %12 = vsyncpa [#allocation4], 0
    // Predicated region
    $region2: #{tpu_custom_call.1} parent=1 // pred_check
      _
    $region3: #{tpu_custom_call.1} parent=1 // pred_check_branch
      %14 = sbr.rel (0) target = $region5
    $region4: #{tpu_custom_call.1} parent=1 // pred_region
      %16 = vsyncadd [#allocation3], 0
      %s18 = sshll.u32 %s0, 4
      %s19 = int_to_ptr.hbm [resolvable:$true] %s18
      %s20 = sshll.u32 [#allocation2], 4
      %s21 = int_to_ptr.vmem [resolvable:$true] %s20
      %23 = dma.hbm_to_vmem [thread:$0]  %s19, 512, %s21, [#allocation3]
    $region5: #{tpu_custom_call.1} parent=1 // pred_fallthru
      _
    // Predicated region
    $region6: #{tpu_custom_call.1} parent=1 // pred_check
      _
    $region7: #{tpu_custom_call.1} parent=1 // pred_check_branch
      %25 = sbr.rel (0) target = $region9
    $region8: #{tpu_custom_call.1} parent=1 // pred_region
      %27 = vsyncadd [#allocation6], 0
      %s28 = sshll.u32 %s1, 4
      %s29 = int_to_ptr.hbm [resolvable:$true] %s28
      %s30 = sshll.u32 [#allocation5], 4
      %s31 = int_to_ptr.vmem [resolvable:$true] %s30
      %36 = dma.hbm_to_vmem [thread:$0]  %s29, 8192, %s31, [#allocation6], 64, 64, 4
    $region9: #{tpu_custom_call.1} parent=1 // pred_fallthru
      _
    // Predicated region
    $region10: #{tpu_custom_call.1} parent=1 // pred_check
      _
    $region11: #{tpu_custom_call.1} parent=1 // pred_check_branch
      %38 = sbr.rel (0) target = $region13
    $region12: #{tpu_custom_call.1} parent=1 // pred_region
      _
    $region13: #{tpu_custom_call.1} parent=1 // pred_fallthru
      _
    // Predicated region
    $region14: #{tpu_custom_call.1} parent=1 // pred_check
      _
    $region15: #{tpu_custom_call.1} parent=1 // pred_check_branch
      %40 = sbr.rel (0) target = $region17
    $region16: #{tpu_custom_call.1} parent=1 // pred_region
      %42 = vsyncadd [#allocation6], 0
      %s43 = sshll.u32 %s3, 4
      %s44 = int_to_ptr.hbm [resolvable:$true] %s43
      %s45 = sshll.u32 [#allocation7], 4
      %s46 = int_to_ptr.vmem [resolvable:$true] %s45
      %51 = dma.hbm_to_vmem [thread:$0]  %s44, 2048, %s46, [#allocation6], 128, 128, 8
    $region17: #{tpu_custom_call.1} parent=1 // pred_fallthru
      _
    // Predicated region
    $region18: #{tpu_custom_call.1} parent=1 // pred_check
      _
    $region19: #{tpu_custom_call.1} parent=1 // pred_check_branch
      %53 = sbr.rel (0) target = $region21
    $region20: #{tpu_custom_call.1} parent=1 // pred_region
      _
    $region21: #{tpu_custom_call.1} parent=1 // pred_fallthru
      _
    // Predicated region
    $region22: #{tpu_custom_call.1} parent=1 // pred_check
      _
    $region23: #{tpu_custom_call.1} parent=1 // pred_check_branch
      %55 = sbr.rel (0) target = $region25
    $region24: #{tpu_custom_call.1} parent=1 // pred_region
      %57 = dma.done [#allocation3], 512
    $region25: #{tpu_custom_call.1} parent=1 // pred_fallthru
      _
    // Predicated region
    $region26: #{tpu_custom_call.1} parent=1 // pred_check
      _
    $region27: #{tpu_custom_call.1} parent=1 // pred_check_branch
      %59 = sbr.rel (0) target = $region29
    $region28: #{tpu_custom_call.1} parent=1 // pred_region
      %61 = dma.done [#allocation6], 8192
    $region29: #{tpu_custom_call.1} parent=1 // pred_fallthru
      _
    // Predicated region
    $region30: #{tpu_custom_call.1} parent=1 // pred_check
      _
    $region31: #{tpu_custom_call.1} parent=1 // pred_check_branch
      %63 = sbr.rel (0) target = $region33
    $region32: #{tpu_custom_call.1} parent=1 // pred_region
      %65 = dma.done [#allocation6], 2048
    $region33: #{tpu_custom_call.1} parent=1 // pred_fallthru
      _
    %v66 = vld [vmem:[#allocation2] sm:$0xff]
    %v67 = vld [vmem:[#allocation2 + $0x8] sm:$0xff]
    %v68 = vld [vmem:[#allocation2 + $0x10] sm:$0xff]
    %v69 = vld [vmem:[#allocation2 + $0x18] sm:$0xff]
    %v70 = vld [vmem:[#allocation5] sm:$0xf]
    %v71 = vld [vmem:[#allocation5 + $0x4] sm:$0xf]
    %v72 = vld [vmem:[#allocation5 + $0x8] sm:$0xf]
    %v73 = vld [vmem:[#allocation5 + $0xc] sm:$0xf]
    %v74 = vld [vmem:[#allocation5 + $0x10] sm:$0xf]
    %v75 = vld [vmem:[#allocation5 + $0x14] sm:$0xf]
    %v76 = vld [vmem:[#allocation5 + $0x18] sm:$0xf]
    %v77 = vld [vmem:[#allocation5 + $0x1c] sm:$0xf]
    %v78 = vld [vmem:[#allocation5 + $0x20] sm:$0xf]
    %v79 = vld [vmem:[#allocation5 + $0x24] sm:$0xf]
    %v80 = vld [vmem:[#allocation5 + $0x28] sm:$0xf]
    %v81 = vld [vmem:[#allocation5 + $0x2c] sm:$0xf]
    %v82 = vld [vmem:[#allocation5 + $0x30] sm:$0xf]
    %v83 = vld [vmem:[#allocation5 + $0x34] sm:$0xf]
    %v84 = vld [vmem:[#allocation5 + $0x38] sm:$0xf]
    %v85 = vld [vmem:[#allocation5 + $0x3c] sm:$0xf]
    %v86 = vld [vmem:[#allocation5 + $0x40] sm:$0xf]
    %v87 = vld [vmem:[#allocation5 + $0x44] sm:$0xf]
    %v88 = vld [vmem:[#allocation5 + $0x48] sm:$0xf]
    %v89 = vld [vmem:[#allocation5 + $0x4c] sm:$0xf]
    %v90 = vld [vmem:[#allocation5 + $0x50] sm:$0xf]
    %v91 = vld [vmem:[#allocation5 + $0x54] sm:$0xf]
    %v92 = vld [vmem:[#allocation5 + $0x58] sm:$0xf]
    %v93 = vld [vmem:[#allocation5 + $0x5c] sm:$0xf]
    %v94 = vld [vmem:[#allocation5 + $0x60] sm:$0xf]
    %v95 = vld [vmem:[#allocation5 + $0x64] sm:$0xf]
    %v96 = vld [vmem:[#allocation5 + $0x68] sm:$0xf]
    %v97 = vld [vmem:[#allocation5 + $0x6c] sm:$0xf]
    %v98 = vld [vmem:[#allocation5 + $0x70] sm:$0xf]
    %v99 = vld [vmem:[#allocation5 + $0x74] sm:$0xf]
    %v100 = vld [vmem:[#allocation5 + $0x78] sm:$0xf]
    %v101 = vld [vmem:[#allocation5 + $0x7c] sm:$0xf]
    %v102 = vld [vmem:[#allocation5 + $0x80] sm:$0xf]
    %v103 = vld [vmem:[#allocation5 + $0x84] sm:$0xf]
    %v104 = vld [vmem:[#allocation5 + $0x88] sm:$0xf]
    %v105 = vld [vmem:[#allocation5 + $0x8c] sm:$0xf]
    %v106 = vld [vmem:[#allocation5 + $0x90] sm:$0xf]
    %v107 = vld [vmem:[#allocation5 + $0x94] sm:$0xf]
    %v108 = vld [vmem:[#allocation5 + $0x98] sm:$0xf]
    %v109 = vld [vmem:[#allocation5 + $0x9c] sm:$0xf]
    %v110 = vld [vmem:[#allocation5 + $0xa0] sm:$0xf]
    %v111 = vld [vmem:[#allocation5 + $0xa4] sm:$0xf]
    %v112 = vld [vmem:[#allocation5 + $0xa8] sm:$0xf]
    %v113 = vld [vmem:[#allocation5 + $0xac] sm:$0xf]
    %v114 = vld [vmem:[#allocation5 + $0xb0] sm:$0xf]
    %v115 = vld [vmem:[#allocation5 + $0xb4] sm:$0xf]
    %v116 = vld [vmem:[#allocation5 + $0xb8] sm:$0xf]
    %v117 = vld [vmem:[#allocation5 + $0xbc] sm:$0xf]
    %v118 = vld [vmem:[#allocation5 + $0xc0] sm:$0xf]
    %v119 = vld [vmem:[#allocation5 + $0xc4] sm:$0xf]
    %v120 = vld [vmem:[#allocation5 + $0xc8] sm:$0xf]
    %v121 = vld [vmem:[#allocation5 + $0xcc] sm:$0xf]
    %v122 = vld [vmem:[#allocation5 + $0xd0] sm:$0xf]
    %v123 = vld [vmem:[#allocation5 + $0xd4] sm:$0xf]
    %v124 = vld [vmem:[#allocation5 + $0xd8] sm:$0xf]
    %v125 = vld [vmem:[#allocation5 + $0xdc] sm:$0xf]
    %v126 = vld [vmem:[#allocation5 + $0xe0] sm:$0xf]
    %v127 = vld [vmem:[#allocation5 + $0xe4] sm:$0xf]
    %v128 = vld [vmem:[#allocation5 + $0xe8] sm:$0xf]
    %v129 = vld [vmem:[#allocation5 + $0xec] sm:$0xf]
    %v130 = vld [vmem:[#allocation5 + $0xf0] sm:$0xf]
    %v131 = vld [vmem:[#allocation5 + $0xf4] sm:$0xf]
    %v132 = vld [vmem:[#allocation5 + $0xf8] sm:$0xf]
    %v133 = vld [vmem:[#allocation5 + $0xfc] sm:$0xf]
    %v134 = vld [vmem:[#allocation5 + $0x100] sm:$0xf]
    %v135 = vld [vmem:[#allocation5 + $0x104] sm:$0xf]
    %v136 = vld [vmem:[#allocation5 + $0x108] sm:$0xf]
    %v137 = vld [vmem:[#allocation5 + $0x10c] sm:$0xf]
    %v138 = vld [vmem:[#allocation5 + $0x110] sm:$0xf]
    %v139 = vld [vmem:[#allocation5 + $0x114] sm:$0xf]
    %v140 = vld [vmem:[#allocation5 + $0x118] sm:$0xf]
    %v141 = vld [vmem:[#allocation5 + $0x11c] sm:$0xf]
    %v142 = vld [vmem:[#allocation5 + $0x120] sm:$0xf]
    %v143 = vld [vmem:[#allocation5 + $0x124] sm:$0xf]
    %v144 = vld [vmem:[#allocation5 + $0x128] sm:$0xf]
    %v145 = vld [vmem:[#allocation5 + $0x12c] sm:$0xf]
    %v146 = vld [vmem:[#allocation5 + $0x130] sm:$0xf]
    %v147 = vld [vmem:[#allocation5 + $0x134] sm:$0xf]
    %v148 = vld [vmem:[#allocation5 + $0x138] sm:$0xf]
    %v149 = vld [vmem:[#allocation5 + $0x13c] sm:$0xf]
    %v150 = vld [vmem:[#allocation5 + $0x140] sm:$0xf]
    %v151 = vld [vmem:[#allocation5 + $0x144] sm:$0xf]
    %v152 = vld [vmem:[#allocation5 + $0x148] sm:$0xf]
    %v153 = vld [vmem:[#allocation5 + $0x14c] sm:$0xf]
    %v154 = vld [vmem:[#allocation5 + $0x150] sm:$0xf]
    %v155 = vld [vmem:[#allocation5 + $0x154] sm:$0xf]
    %v156 = vld [vmem:[#allocation5 + $0x158] sm:$0xf]
    %v157 = vld [vmem:[#allocation5 + $0x15c] sm:$0xf]
    %v158 = vld [vmem:[#allocation5 + $0x160] sm:$0xf]
    %v159 = vld [vmem:[#allocation5 + $0x164] sm:$0xf]
    %v160 = vld [vmem:[#allocation5 + $0x168] sm:$0xf]
    %v161 = vld [vmem:[#allocation5 + $0x16c] sm:$0xf]
    %v162 = vld [vmem:[#allocation5 + $0x170] sm:$0xf]
    %v163 = vld [vmem:[#allocation5 + $0x174] sm:$0xf]
    %v164 = vld [vmem:[#allocation5 + $0x178] sm:$0xf]
    %v165 = vld [vmem:[#allocation5 + $0x17c] sm:$0xf]
    %v166 = vld [vmem:[#allocation5 + $0x180] sm:$0xf]
    %v167 = vld [vmem:[#allocation5 + $0x184] sm:$0xf]
    %v168 = vld [vmem:[#allocation5 + $0x188] sm:$0xf]
    %v169 = vld [vmem:[#allocation5 + $0x18c] sm:$0xf]
    %v170 = vld [vmem:[#allocation5 + $0x190] sm:$0xf]
    %v171 = vld [vmem:[#allocation5 + $0x194] sm:$0xf]
    %v172 = vld [vmem:[#allocation5 + $0x198] sm:$0xf]
    %v173 = vld [vmem:[#allocation5 + $0x19c] sm:$0xf]
    %v174 = vld [vmem:[#allocation5 + $0x1a0] sm:$0xf]
    %v175 = vld [vmem:[#allocation5 + $0x1a4] sm:$0xf]
    %v176 = vld [vmem:[#allocation5 + $0x1a8] sm:$0xf]
    %v177 = vld [vmem:[#allocation5 + $0x1ac] sm:$0xf]
    %v178 = vld [vmem:[#allocation5 + $0x1b0] sm:$0xf]
    %v179 = vld [vmem:[#allocation5 + $0x1b4] sm:$0xf]
    %v180 = vld [vmem:[#allocation5 + $0x1b8] sm:$0xf]
    %v181 = vld [vmem:[#allocation5 + $0x1bc] sm:$0xf]
    %v182 = vld [vmem:[#allocation5 + $0x1c0] sm:$0xf]
    %v183 = vld [vmem:[#allocation5 + $0x1c4] sm:$0xf]
    %v184 = vld [vmem:[#allocation5 + $0x1c8] sm:$0xf]
    %v185 = vld [vmem:[#allocation5 + $0x1cc] sm:$0xf]
    %v186 = vld [vmem:[#allocation5 + $0x1d0] sm:$0xf]
    %v187 = vld [vmem:[#allocation5 + $0x1d4] sm:$0xf]
    %v188 = vld [vmem:[#allocation5 + $0x1d8] sm:$0xf]
    %v189 = vld [vmem:[#allocation5 + $0x1dc] sm:$0xf]
    %v190 = vld [vmem:[#allocation5 + $0x1e0] sm:$0xf]
    %v191 = vld [vmem:[#allocation5 + $0x1e4] sm:$0xf]
    %v192 = vld [vmem:[#allocation5 + $0x1e8] sm:$0xf]
    %v193 = vld [vmem:[#allocation5 + $0x1ec] sm:$0xf]
    %v194 = vld [vmem:[#allocation5 + $0x1f0] sm:$0xf]
    %v195 = vld [vmem:[#allocation5 + $0x1f4] sm:$0xf]
    %v196 = vld [vmem:[#allocation5 + $0x1f8] sm:$0xf]
    %v197 = vld [vmem:[#allocation5 + $0x1fc] sm:$0xf]
    %v198 = vld [vmem:[%s2] sm:$0x1]
    %v200 = vperm.slane %v198, 0
    %v206 = vunpack.c.l.b16 %v66
    %v207 = vunpack.c.h.b16 %v66
    %v208 = vunpack.c.l.b16 %v67
    %v209 = vunpack.c.h.b16 %v67
    %v210 = vunpack.c.l.b16 %v68
    %v211 = vunpack.c.h.b16 %v68
    %v212 = vunpack.c.l.b16 %v69
    %v213 = vunpack.c.h.b16 %v69
    %v214 = vpack.c.b16 %v206, %v206
    %v215 = vpack.c.b16 %v207, %v207
    %v216 = vpack.c.b16 %v208, %v208
    %v217 = vpack.c.b16 %v209, %v209
    %v218 = vpack.c.b16 %v210, %v210
    %v219 = vpack.c.b16 %v211, %v211
    %v220 = vpack.c.b16 %v212, %v212
    %v221 = vpack.c.b16 %v213, %v213
    %v358 = vunpack.c.l.b16 %v70
    %v359 = vunpack.c.l.b16 %v71
    %v360 = vunpack.c.l.b16 %v72
    %v361 = vunpack.c.l.b16 %v73
    %v362 = vunpack.c.l.b16 %v74
    %v363 = vunpack.c.l.b16 %v75
    %v364 = vunpack.c.l.b16 %v76
    %v365 = vunpack.c.l.b16 %v77
    %v366 = vunpack.c.l.b16 %v78
    %v367 = vunpack.c.l.b16 %v79
    %v368 = vunpack.c.l.b16 %v80
    %v369 = vunpack.c.l.b16 %v81
    %v370 = vunpack.c.l.b16 %v82
    %v371 = vunpack.c.l.b16 %v83
    %v372 = vunpack.c.l.b16 %v84
    %v373 = vunpack.c.l.b16 %v85
    %v374 = vunpack.c.l.b16 %v86
    %v375 = vunpack.c.l.b16 %v87
    %v376 = vunpack.c.l.b16 %v88
    %v377 = vunpack.c.l.b16 %v89
    %v378 = vunpack.c.l.b16 %v90
    %v379 = vunpack.c.l.b16 %v91
    %v380 = vunpack.c.l.b16 %v92
    %v381 = vunpack.c.l.b16 %v93
    %v382 = vunpack.c.l.b16 %v94
    %v383 = vunpack.c.l.b16 %v95
    %v384 = vunpack.c.l.b16 %v96
    %v385 = vunpack.c.l.b16 %v97
    %v386 = vunpack.c.l.b16 %v98
    %v387 = vunpack.c.l.b16 %v99
    %v388 = vunpack.c.l.b16 %v100
    %v389 = vunpack.c.l.b16 %v101
    %v390 = vunpack.c.l.b16 %v102
    %v391 = vunpack.c.l.b16 %v103
    %v392 = vunpack.c.l.b16 %v104
    %v393 = vunpack.c.l.b16 %v105
    %v394 = vunpack.c.l.b16 %v106
    %v395 = vunpack.c.l.b16 %v107
    %v396 = vunpack.c.l.b16 %v108
    %v397 = vunpack.c.l.b16 %v109
    %v398 = vunpack.c.l.b16 %v110
    %v399 = vunpack.c.l.b16 %v111
    %v400 = vunpack.c.l.b16 %v112
    %v401 = vunpack.c.l.b16 %v113
    %v402 = vunpack.c.l.b16 %v114
    %v403 = vunpack.c.l.b16 %v115
    %v404 = vunpack.c.l.b16 %v116
    %v405 = vunpack.c.l.b16 %v117
    %v406 = vunpack.c.l.b16 %v118
    %v407 = vunpack.c.l.b16 %v119
    %v408 = vunpack.c.l.b16 %v120
    %v409 = vunpack.c.l.b16 %v121
    %v410 = vunpack.c.l.b16 %v122
    %v411 = vunpack.c.l.b16 %v123
    %v412 = vunpack.c.l.b16 %v124
    %v413 = vunpack.c.l.b16 %v125
    %v414 = vunpack.c.l.b16 %v126
    %v415 = vunpack.c.l.b16 %v127
    %v416 = vunpack.c.l.b16 %v128
    %v417 = vunpack.c.l.b16 %v129
    %v418 = vunpack.c.l.b16 %v130
    %v419 = vunpack.c.l.b16 %v131
    %v420 = vunpack.c.l.b16 %v132
    %v421 = vunpack.c.l.b16 %v133
    %v422 = vunpack.c.l.b16 %v134
    %v423 = vunpack.c.l.b16 %v135
    %v424 = vunpack.c.l.b16 %v136
    %v425 = vunpack.c.l.b16 %v137
    %v426 = vunpack.c.l.b16 %v138
    %v427 = vunpack.c.l.b16 %v139
    %v428 = vunpack.c.l.b16 %v140
    %v429 = vunpack.c.l.b16 %v141
    %v430 = vunpack.c.l.b16 %v142
    %v431 = vunpack.c.l.b16 %v143
    %v432 = vunpack.c.l.b16 %v144
    %v433 = vunpack.c.l.b16 %v145
    %v434 = vunpack.c.l.b16 %v146
    %v435 = vunpack.c.l.b16 %v147
    %v436 = vunpack.c.l.b16 %v148
    %v437 = vunpack.c.l.b16 %v149
    %v438 = vunpack.c.l.b16 %v150
    %v439 = vunpack.c.l.b16 %v151
    %v440 = vunpack.c.l.b16 %v152
    %v441 = vunpack.c.l.b16 %v153
    %v442 = vunpack.c.l.b16 %v154
    %v443 = vunpack.c.l.b16 %v155
    %v444 = vunpack.c.l.b16 %v156
    %v445 = vunpack.c.l.b16 %v157
    %v446 = vunpack.c.l.b16 %v158
    %v447 = vunpack.c.l.b16 %v159
    %v448 = vunpack.c.l.b16 %v160
    %v449 = vunpack.c.l.b16 %v161
    %v450 = vunpack.c.l.b16 %v162
    %v451 = vunpack.c.l.b16 %v163
    %v452 = vunpack.c.l.b16 %v164
    %v453 = vunpack.c.l.b16 %v165
    %v454 = vunpack.c.l.b16 %v166
    %v455 = vunpack.c.l.b16 %v167
    %v456 = vunpack.c.l.b16 %v168
    %v457 = vunpack.c.l.b16 %v169
    %v458 = vunpack.c.l.b16 %v170
    %v459 = vunpack.c.l.b16 %v171
    %v460 = vunpack.c.l.b16 %v172
    %v461 = vunpack.c.l.b16 %v173
    %v462 = vunpack.c.l.b16 %v174
    %v463 = vunpack.c.l.b16 %v175
    %v464 = vunpack.c.l.b16 %v176
    %v465 = vunpack.c.l.b16 %v177
    %v466 = vunpack.c.l.b16 %v178
    %v467 = vunpack.c.l.b16 %v179
    %v468 = vunpack.c.l.b16 %v180
    %v469 = vunpack.c.l.b16 %v181
    %v470 = vunpack.c.l.b16 %v182
    %v471 = vunpack.c.l.b16 %v183
    %v472 = vunpack.c.l.b16 %v184
    %v473 = vunpack.c.l.b16 %v185
    %v474 = vunpack.c.l.b16 %v186
    %v475 = vunpack.c.l.b16 %v187
    %v476 = vunpack.c.l.b16 %v188
    %v477 = vunpack.c.l.b16 %v189
    %v478 = vunpack.c.l.b16 %v190
    %v479 = vunpack.c.l.b16 %v191
    %v480 = vunpack.c.l.b16 %v192
    %v481 = vunpack.c.l.b16 %v193
    %v482 = vunpack.c.l.b16 %v194
    %v483 = vunpack.c.l.b16 %v195
    %v484 = vunpack.c.l.b16 %v196
    %v485 = vunpack.c.l.b16 %v197
    %v486 = vpack.c.b16 %v359, %v358
    %v487 = vpack.c.b16 %v361, %v360
    %v488 = vpack.c.b16 %v363, %v362
    %v489 = vpack.c.b16 %v365, %v364
    %v490 = vpack.c.b16 %v367, %v366
    %v491 = vpack.c.b16 %v369, %v368
    %v492 = vpack.c.b16 %v371, %v370
    %v493 = vpack.c.b16 %v373, %v372
    %v494 = vpack.c.b16 %v375, %v374
    %v495 = vpack.c.b16 %v377, %v376
    %v496 = vpack.c.b16 %v379, %v378
    %v497 = vpack.c.b16 %v381, %v380
    %v498 = vpack.c.b16 %v383, %v382
    %v499 = vpack.c.b16 %v385, %v384
    %v500 = vpack.c.b16 %v387, %v386
    %v501 = vpack.c.b16 %v389, %v388
    %v502 = vpack.c.b16 %v391, %v390
    %v503 = vpack.c.b16 %v393, %v392
    %v504 = vpack.c.b16 %v395, %v394
    %v505 = vpack.c.b16 %v397, %v396
    %v506 = vpack.c.b16 %v399, %v398
    %v507 = vpack.c.b16 %v401, %v400
    %v508 = vpack.c.b16 %v403, %v402
    %v509 = vpack.c.b16 %v405, %v404
    %v510 = vpack.c.b16 %v407, %v406
    %v511 = vpack.c.b16 %v409, %v408
    %v512 = vpack.c.b16 %v411, %v410
    %v513 = vpack.c.b16 %v413, %v412
    %v514 = vpack.c.b16 %v415, %v414
    %v515 = vpack.c.b16 %v417, %v416
    %v516 = vpack.c.b16 %v419, %v418
    %v517 = vpack.c.b16 %v421, %v420
    %v518 = vpack.c.b16 %v423, %v422
    %v519 = vpack.c.b16 %v425, %v424
    %v520 = vpack.c.b16 %v427, %v426
    %v521 = vpack.c.b16 %v429, %v428
    %v522 = vpack.c.b16 %v431, %v430
    %v523 = vpack.c.b16 %v433, %v432
    %v524 = vpack.c.b16 %v435, %v434
    %v525 = vpack.c.b16 %v437, %v436
    %v526 = vpack.c.b16 %v439, %v438
    %v527 = vpack.c.b16 %v441, %v440
    %v528 = vpack.c.b16 %v443, %v442
    %v529 = vpack.c.b16 %v445, %v444
    %v530 = vpack.c.b16 %v447, %v446
    %v531 = vpack.c.b16 %v449, %v448
    %v532 = vpack.c.b16 %v451, %v450
    %v533 = vpack.c.b16 %v453, %v452
    %v534 = vpack.c.b16 %v455, %v454
    %v535 = vpack.c.b16 %v457, %v456
    %v536 = vpack.c.b16 %v459, %v458
    %v537 = vpack.c.b16 %v461, %v460
    %v538 = vpack.c.b16 %v463, %v462
    %v539 = vpack.c.b16 %v465, %v464
    %v540 = vpack.c.b16 %v467, %v466
    %v541 = vpack.c.b16 %v469, %v468
    %v542 = vpack.c.b16 %v471, %v470
    %v543 = vpack.c.b16 %v473, %v472
    %v544 = vpack.c.b16 %v475, %v474
    %v545 = vpack.c.b16 %v477, %v476
    %v546 = vpack.c.b16 %v479, %v478
    %v547 = vpack.c.b16 %v481, %v480
    %v548 = vpack.c.b16 %v483, %v482
    %v549 = vpack.c.b16 %v485, %v484
    %614 = vmatpush.bf16.msra.mxu0 %v493
    %615 = vmatpush.bf16.msra.mxu0 %v492
    %616 = vmatpush.bf16.msra.mxu0 %v491
    %617 = vmatpush.bf16.msra.mxu0 %v490
    %618 = vmatpush.bf16.msra.mxu0 %v489
    %619 = vmatpush.bf16.msra.mxu0 %v488
    %620 = vmatpush.bf16.msra.mxu0 %v487
    %621 = vmatpush.bf16.msra.mxu0 %v486
    %622 = vmatmul.bf16.gmra.mxu0 %v214
    %v623 = vpop.f32.mrf.mxu0
    %v624 = vadd.f32 %v200, %v623
    %v625 = vpop.f32.mrf.mxu0
    %626 = vdwg.mxu0
    %627 = vmatpush.bf16.msra.mxu0 %v501
    %628 = vmatpush.bf16.msra.mxu0 %v500
    %629 = vmatpush.bf16.msra.mxu0 %v499
    %630 = vmatpush.bf16.msra.mxu0 %v498
    %631 = vmatpush.bf16.msra.mxu0 %v497
    %632 = vmatpush.bf16.msra.mxu0 %v496
    %633 = vmatpush.bf16.msra.mxu0 %v495
    %634 = vmatpush.bf16.msra.mxu0 %v494
    %635 = vmatmul.bf16.gmra.mxu0 %v215
    %v636 = vpop.f32.mrf.mxu0
    %v637 = vadd.f32 %v624, %v636
    %v638 = vpop.f32.mrf.mxu0
    %639 = vdwg.mxu0
    %640 = vmatpush.bf16.msra.mxu0 %v509
    %641 = vmatpush.bf16.msra.mxu0 %v508
    %642 = vmatpush.bf16.msra.mxu0 %v507
    %643 = vmatpush.bf16.msra.mxu0 %v506
    %644 = vmatpush.bf16.msra.mxu0 %v505
    %645 = vmatpush.bf16.msra.mxu0 %v504
    %646 = vmatpush.bf16.msra.mxu0 %v503
    %647 = vmatpush.bf16.msra.mxu0 %v502
    %648 = vmatmul.bf16.gmra.mxu0 %v216
    %v649 = vpop.f32.mrf.mxu0
    %v650 = vadd.f32 %v637, %v649
    %v651 = vpop.f32.mrf.mxu0
    %652 = vdwg.mxu0
    %653 = vmatpush.bf16.msra.mxu0 %v517
    %654 = vmatpush.bf16.msra.mxu0 %v516
    %655 = vmatpush.bf16.msra.mxu0 %v515
    %656 = vmatpush.bf16.msra.mxu0 %v514
    %657 = vmatpush.bf16.msra.mxu0 %v513
    %658 = vmatpush.bf16.msra.mxu0 %v512
    %659 = vmatpush.bf16.msra.mxu0 %v511
    %660 = vmatpush.bf16.msra.mxu0 %v510
    %661 = vmatmul.bf16.gmra.mxu0 %v217
    %v662 = vpop.f32.mrf.mxu0
    %v663 = vadd.f32 %v650, %v662
    %v664 = vpop.f32.mrf.mxu0
    %665 = vdwg.mxu0
    %666 = vmatpush.bf16.msra.mxu0 %v525
    %667 = vmatpush.bf16.msra.mxu0 %v524
    %668 = vmatpush.bf16.msra.mxu0 %v523
    %669 = vmatpush.bf16.msra.mxu0 %v522
    %670 = vmatpush.bf16.msra.mxu0 %v521
    %671 = vmatpush.bf16.msra.mxu0 %v520
    %672 = vmatpush.bf16.msra.mxu0 %v519
    %673 = vmatpush.bf16.msra.mxu0 %v518
    %674 = vmatmul.bf16.gmra.mxu0 %v218
    %v675 = vpop.f32.mrf.mxu0
    %v676 = vadd.f32 %v663, %v675
    %v677 = vpop.f32.mrf.mxu0
    %678 = vdwg.mxu0
    %679 = vmatpush.bf16.msra.mxu0 %v533
    %680 = vmatpush.bf16.msra.mxu0 %v532
    %681 = vmatpush.bf16.msra.mxu0 %v531
    %682 = vmatpush.bf16.msra.mxu0 %v530
    %683 = vmatpush.bf16.msra.mxu0 %v529
    %684 = vmatpush.bf16.msra.mxu0 %v528
    %685 = vmatpush.bf16.msra.mxu0 %v527
    %686 = vmatpush.bf16.msra.mxu0 %v526
    %687 = vmatmul.bf16.gmra.mxu0 %v219
    %v688 = vpop.f32.mrf.mxu0
    %v689 = vadd.f32 %v676, %v688
    %v690 = vpop.f32.mrf.mxu0
    %691 = vdwg.mxu0
    %692 = vmatpush.bf16.msra.mxu0 %v541
    %693 = vmatpush.bf16.msra.mxu0 %v540
    %694 = vmatpush.bf16.msra.mxu0 %v539
    %695 = vmatpush.bf16.msra.mxu0 %v538
    %696 = vmatpush.bf16.msra.mxu0 %v537
    %697 = vmatpush.bf16.msra.mxu0 %v536
    %698 = vmatpush.bf16.msra.mxu0 %v535
    %699 = vmatpush.bf16.msra.mxu0 %v534
    %700 = vmatmul.bf16.gmra.mxu0 %v220
    %v701 = vpop.f32.mrf.mxu0
    %v702 = vadd.f32 %v689, %v701
    %v703 = vpop.f32.mrf.mxu0
    %704 = vdwg.mxu0
    %705 = vmatpush.bf16.msra.mxu0 %v549
    %706 = vmatpush.bf16.msra.mxu0 %v548
    %707 = vmatpush.bf16.msra.mxu0 %v547
    %708 = vmatpush.bf16.msra.mxu0 %v546
    %709 = vmatpush.bf16.msra.mxu0 %v545
    %710 = vmatpush.bf16.msra.mxu0 %v544
    %711 = vmatpush.bf16.msra.mxu0 %v543
    %712 = vmatpush.bf16.msra.mxu0 %v542
    %713 = vmatmul.bf16.gmra.mxu0 %v221
    %v714 = vpop.f32.mrf.mxu0
    %v715 = vadd.f32 %v702, %v714
    %v716 = vpop.f32.mrf.mxu0
    %717 = vdwg.mxu0
    %v718 = vmax.f32 %v715, 0.0
    %v719 = vld [vmem:[#allocation7] sm:$0xff]
    %v720 = vld [vmem:[#allocation7 + $0x8] sm:$0xff]
    %v721 = vld [vmem:[#allocation7 + $0x10] sm:$0xff]
    %v722 = vld [vmem:[#allocation7 + $0x18] sm:$0xff]
    %v723 = vld [vmem:[#allocation7 + $0x20] sm:$0xff]
    %v724 = vld [vmem:[#allocation7 + $0x28] sm:$0xff]
    %v725 = vld [vmem:[#allocation7 + $0x30] sm:$0xff]
    %v726 = vld [vmem:[#allocation7 + $0x38] sm:$0xff]
    %v727 = vld [vmem:[#allocation7 + $0x40] sm:$0xff]
    %v728 = vld [vmem:[#allocation7 + $0x48] sm:$0xff]
    %v729 = vld [vmem:[#allocation7 + $0x50] sm:$0xff]
    %v730 = vld [vmem:[#allocation7 + $0x58] sm:$0xff]
    %v731 = vld [vmem:[#allocation7 + $0x60] sm:$0xff]
    %v732 = vld [vmem:[#allocation7 + $0x68] sm:$0xff]
    %v733 = vld [vmem:[#allocation7 + $0x70] sm:$0xff]
    %v734 = vld [vmem:[#allocation7 + $0x78] sm:$0xff]
    %v735 = vld [vmem:[%s4] sm:$0x1]
    %v737 = vperm.slane %v735, 0
    %739 = vmatpush.msra.mxu0 %v734
    %740 = vmatpush.msra.mxu0 %v733
    %741 = vmatpush.msra.mxu0 %v732
    %742 = vmatpush.msra.mxu0 %v731
    %743 = vmatpush.msra.mxu0 %v730
    %744 = vmatpush.msra.mxu0 %v729
    %745 = vmatpush.msra.mxu0 %v728
    %746 = vmatpush.msra.mxu0 %v727
    %747 = vmatpush.msra.mxu0 %v726
    %748 = vmatpush.msra.mxu0 %v725
    %749 = vmatpush.msra.mxu0 %v724
    %750 = vmatpush.msra.mxu0 %v723
    %751 = vmatpush.msra.mxu0 %v722
    %752 = vmatpush.msra.mxu0 %v721
    %753 = vmatpush.msra.mxu0 %v720
    %754 = vmatpush.msra.mxu0 %v719
    %755 = vmatmul.f32.gmra.mxu0 %v718
    %v756 = vpop.f32.mrf.mxu0
    %v757 = vadd.f32 %v737, %v756
    %758 = vdwg.mxu0
    %759 = vmax.xlane.f32.xlu0 %v757
    %v760 = vpop.xlane.xlu0 %759
    %v761 = vsub.f32 %v757, %v760
    %v762 = vmul.f32 %v761, 1.442695
    %v763 = vpow.pop %v762
    %764 = vadd.xlane.f32.xlu0 %v763
    %v765 = vpop.xlane.xlu0 %764
    %v766 = vlog2.pop %v765
    %v767 = vmul.f32 %v766, 0.6931472
    %v768 = vsub.f32 %v761, %v767
    %769 = vst [vmem:[#allocation8] sm:$0xff] %v768
    // Predicated region
    $region34: #{tpu_custom_call.1} parent=1 // pred_check
      _
    $region35: #{tpu_custom_call.1} parent=1 // pred_check_branch
      %771 = sbr.rel (0) target = $region37
    $region36: #{tpu_custom_call.1} parent=1 // pred_region
      %773 = vsyncadd [#allocation4], 0
      %s775 = sshll.u32 [#allocation8], 4
      %s776 = int_to_ptr.vmem [resolvable:$true] %s775
      %s777 = sshll.u32 %s5, 4
      %s778 = int_to_ptr.hbm [resolvable:$true] %s777
      %780 = dma.vmem_to_hbm [thread:$0]  %s776, 128, %s778, [#allocation4]
    $region37: #{tpu_custom_call.1} parent=1 // pred_fallthru
      _
    // Predicated region
    $region38: #{tpu_custom_call.1} parent=1 // pred_check
      _
    $region39: #{tpu_custom_call.1} parent=1 // pred_check_branch
      %782 = sbr.rel (0) target = $region41
    $region40: #{tpu_custom_call.1} parent=1 // pred_region
      %784 = dma.done [#allocation4], 128
    $region41: #{tpu_custom_call.1} parent=1 // pred_fallthru
      _
    %785 = vsyncpa [#allocation3], 1
    %786 = vsyncpa [#allocation6], 1
    %787 = vsyncpa [#allocation4], 1

</llo_original>
